<compile_context>
chip_gen: v6e
topology: v6e:2x2x1
jax: 0.10.0
libtpu: 0.0.40
codegen_flags: <defaults>
</compile_context>

<pallas_src>
import functools
import math

import jax
import jax.numpy as jnp
from jax.experimental import pallas as pl
from jax.experimental.pallas import tpu as pltpu

C = 512                # slab lane width (multiple of 128)
BLOCK_ROWS_MAX = 512   # 512 x 512 x 4B = 1 MiB per f32 input buffer (v7x-safe)
PAD_SENTINEL = -1e4    # exp(-1e4) == 0 in f32 -> padded element loss == exactly 0


def _round_up(a, b):
    return pl.cdiv(a, b) * b


def _qfocal_elementwise(x, y, gamma, alpha):
    """Elementwise QFocal loss in f32 (BCE-with-logits base loss).

    Uses a single exp: e = exp(-|x|) feeds both log1p(e) (softplus term of the
    numerically-stable BCE-with-logits) and the sigmoid.
    """
    e = jnp.exp(-jnp.abs(x))                           # exp(-|x|)
    bce = jnp.maximum(x, 0.0) - x * y + jnp.log1p(e)   # BCEWithLogits(red='none')
    inv = 1.0 / (1.0 + e)
    pred_prob = jnp.where(x >= 0.0, inv, e * inv)      # == sigmoid(x)
    alpha_factor = y * alpha + (1.0 - y) * (1.0 - alpha)
    d = jnp.abs(y - pred_prob)
    if gamma == 1.5:
        modulating = d * jnp.sqrt(d)                   # exact d ** 1.5
    else:
        # d ** gamma lowers to exp(gamma*log(d)); fine for the forward pass.
        modulating = d ** gamma
    return bce * alpha_factor * modulating


def _qfocal_reduce_kernel(pred_ref, true_ref, out_ref, acc_ref, *, gamma, alpha):
    j = pl.program_id(1)

    @pl.when(j == 0)
    def _():
        acc_ref[...] = jnp.zeros_like(acc_ref)

    x = pred_ref[...].astype(jnp.float32)
    y = true_ref[...].astype(jnp.float32)
    # Elementwise accumulation (pure VPU) -- no per-step reduce-to-scalar.
    acc_ref[...] += _qfocal_elementwise(x, y, gamma, alpha)

    @pl.when(j == pl.num_programs(1) - 1)
    def _():
        acc = acc_ref[...]
        br, c = acc.shape
        # (br, c) -> (br//8, 8, c) keeps the (8,128) tiling; the axis-0 sum is
        # a tree of elementwise vreg adds (VPU), no cross-lane XLU reduce.
        out_ref[...] = acc.reshape(br // 8, 8, c).sum(axis=0)


def _qfocal_none_kernel(pred_ref, true_ref, out_ref, *, gamma, alpha):
    x = pred_ref[...].astype(jnp.float32)
    y = true_ref[...].astype(jnp.float32)
    out_ref[...] = _qfocal_elementwise(x, y, gamma, alpha).astype(out_ref.dtype)


def qfocal_loss(pred, true, gamma=1.5, alpha=0.25, reduction="mean"):
    """QFocalLoss(BCEWithLogitsLoss(reduction=reduction)) forward pass."""
    assert pred.shape == true.shape
    orig_shape = pred.shape
    n_valid = int(math.prod(orig_shape))

    n_rows = pl.cdiv(n_valid, C)
    block_rows = min(BLOCK_ROWS_MAX, _round_up(n_rows, 8))

    if reduction in ("mean", "sum"):
        n_cores = 2  # megacore split on v7x; runs serially (still correct) on v5e/v6e
        padded_rows = _round_up(n_rows, n_cores * block_rows)
        steps = padded_rows // (n_cores * block_rows)
        padded = padded_rows * C

        pred_flat = pred.reshape(-1)
        true_flat = true.reshape(-1)
        if padded != n_valid:
            # Sentinel padding makes the padded loss exactly 0 -> no in-kernel mask.
            pred_flat = jnp.pad(pred_flat, (0, padded - n_valid),
                                constant_values=PAD_SENTINEL)
            true_flat = jnp.pad(true_flat, (0, padded - n_valid))
        pred_slab = pred_flat.reshape(padded_rows, C)
        true_slab = true_flat.reshape(padded_rows, C)

        in_spec = pl.BlockSpec((block_rows, C), lambda i, j: (i * steps + j, 0))
        kernel = functools.partial(_qfocal_reduce_kernel, gamma=gamma, alpha=alpha)
        partials = pl.pallas_call(
            kernel,
            out_shape=jax.ShapeDtypeStruct((n_cores * 8, C), jnp.float32),
            grid_spec=pltpu.PrefetchScalarGridSpec(
                num_scalar_prefetch=0,
                grid=(n_cores, steps),
                in_specs=[in_spec, in_spec],
                out_specs=pl.BlockSpec((8, C), lambda i, j: (i, 0)),
                scratch_shapes=[pltpu.VMEM((block_rows, C), jnp.float32)],
            ),
            compiler_params=pltpu.CompilerParams(
                dimension_semantics=("parallel", "arbitrary")),
        )(pred_slab, true_slab)

        total = jnp.sum(partials)  # tiny (2*8*512) final reduce in XLA
        if reduction == "mean":
            total = total / jnp.float32(n_valid)
        return total

    else:  # reduction == 'none'
        padded_rows = _round_up(n_rows, block_rows)
        padded = padded_rows * C

        pred_flat = pred.reshape(-1)
        true_flat = true.reshape(-1)
        if padded != n_valid:
            pred_flat = jnp.pad(pred_flat, (0, padded - n_valid))
            true_flat = jnp.pad(true_flat, (0, padded - n_valid))
        pred_slab = pred_flat.reshape(padded_rows, C)
        true_slab = true_flat.reshape(padded_rows, C)

        spec = pl.BlockSpec((block_rows, C), lambda i: (i, 0))
        kernel = functools.partial(_qfocal_none_kernel, gamma=gamma, alpha=alpha)
        out = pl.pallas_call(
            kernel,
            out_shape=jax.ShapeDtypeStruct((padded_rows, C), pred.dtype),
            grid_spec=pltpu.PrefetchScalarGridSpec(
                num_scalar_prefetch=0,
                grid=(padded_rows // block_rows,),
                in_specs=[spec, spec],
                out_specs=spec,
            ),
            compiler_params=pltpu.CompilerParams(
                dimension_semantics=("parallel",)),
        )(pred_slab, true_slab)

        if padded == n_valid:
            return out.reshape(orig_shape)      # free reshape, no slice copy
        return out.reshape(-1)[:n_valid].reshape(orig_shape)


def _qfocal_ref(pred, true, gamma=1.5, alpha=0.25, reduction="mean"):
    x = pred.astype(jnp.float32)
    y = true.astype(jnp.float32)
    bce = jnp.maximum(x, 0.0) - x * y + jnp.log1p(jnp.exp(-jnp.abs(x)))
    pred_prob = jax.nn.sigmoid(x)
    alpha_factor = y * alpha + (1.0 - y) * (1.0 - alpha)
    modulating = jnp.abs(y - pred_prob) ** gamma
    loss = bce * alpha_factor * modulating
    if reduction == "mean":
        return loss.mean()
    elif reduction == "sum":
        return loss.sum()
    return loss


if __name__ == "__main__":
    key = jax.random.PRNGKey(0)
    k1, k2, k3, k4 = jax.random.split(key, 4)

    # Detection-head-like logits/targets, NCHW.
    pred = jax.random.normal(k1, (2, 4, 16, 16), dtype=jnp.float32) * 2.0
    true = (jax.random.uniform(k2, (2, 4, 16, 16)) > 0.8).astype(jnp.float32)

    out_mean = jax.block_until_ready(qfocal_loss(pred, true, reduction="mean"))
    out_sum = jax.block_until_ready(qfocal_loss(pred, true, reduction="sum"))
    out_none = jax.block_until_ready(qfocal_loss(pred, true, reduction="none"))

    ref_mean = _qfocal_ref(pred, true, reduction="mean")
    ref_sum = _qfocal_ref(pred, true, reduction="sum")
    ref_none = _qfocal_ref(pred, true, reduction="none")

    assert jnp.allclose(out_mean, ref_mean, rtol=1e-5, atol=1e-6), (out_mean, ref_mean)
    assert jnp.allclose(out_sum, ref_sum, rtol=1e-5, atol=1e-4), (out_sum, ref_sum)
    assert jnp.allclose(out_none, ref_none, rtol=1e-5, atol=1e-6)

    # Non-aligned shape exercises the sentinel-padding / slicing paths.
    pred2 = jax.random.normal(k3, (3, 5, 7, 11), dtype=jnp.float32) * 2.0
    true2 = (jax.random.uniform(k4, (3, 5, 7, 11)) > 0.8).astype(jnp.float32)

    out2_mean = jax.block_until_ready(qfocal_loss(pred2, true2, reduction="mean"))
    out2_none = jax.block_until_ready(qfocal_loss(pred2, true2, reduction="none"))
    assert jnp.allclose(out2_mean, _qfocal_ref(pred2, true2, reduction="mean"),
                        rtol=1e-5, atol=1e-6)
    assert jnp.allclose(out2_none, _qfocal_ref(pred2, true2, reduction="none"),
                        rtol=1e-5, atol=1e-6)

    print("KERNEL_OK")
</pallas_src>

<mosaic_0001>
module attributes {stable_mosaic.version = 11 : i64} {
  func.func @_qfocal_reduce_kernel(%arg0: i32, %arg1: i32, %arg2: memref<8x512xf32, #tpu.memory_space<vmem>>, %arg3: memref<8x512xf32, #tpu.memory_space<vmem>>, %arg4: memref<8x512xf32, #tpu.memory_space<vmem>>, %arg5: memref<8x512xf32, #tpu.memory_space<vmem>>) attributes {dimension_semantics = [#tpu.dimension_semantics<parallel>, #tpu.dimension_semantics<arbitrary>], iteration_bounds = array<i64: 2, 1>, scalar_prefetch = 0 : i64, scratch_operands = 1 : i64, tpu.core_type = #tpu.core_type<tc>, window_params = [{transform_indices = @transform_0, window_bounds = array<i64: 8, 512>}, {transform_indices = @transform_1, window_bounds = array<i64: 8, 512>}, {transform_indices = @transform_2, window_bounds = array<i64: 8, 512>}]} {
    %c0_i32 = arith.constant 0 : i32
    %0 = arith.cmpi eq, %arg1, %c0_i32 : i32
    %1 = arith.extui %0 : i1 to i32
    %c0_i32_0 = arith.constant 0 : i32
    %2 = arith.cmpi ne, %1, %c0_i32_0 : i32
    scf.if %2 {
      %cst_17 = arith.constant 0.000000e+00 : f32
      %42 = vector.broadcast %cst_17 : f32 to vector<8x512xf32>
      %c0_18 = arith.constant 0 : index
      %c0_19 = arith.constant 0 : index
      %43 = vector.load %arg5[%c0_18, %c0_19] : memref<8x512xf32, #tpu.memory_space<vmem>>, vector<8x512xf32>
      tpu.vector_store %arg5[%c0_18, %c0_19], %42 {strides = array<i32>} : memref<8x512xf32, #tpu.memory_space<vmem>>, vector<8x512xf32>,
    } else {
    }
    %c0 = arith.constant 0 : index
    %c0_1 = arith.constant 0 : index
    %3 = vector.load %arg2[%c0, %c0_1] : memref<8x512xf32, #tpu.memory_space<vmem>>, vector<8x512xf32>
    %c0_2 = arith.constant 0 : index
    %c0_3 = arith.constant 0 : index
    %4 = vector.load %arg3[%c0_2, %c0_3] : memref<8x512xf32, #tpu.memory_space<vmem>>, vector<8x512xf32>
    %c0_4 = arith.constant 0 : index
    %c0_5 = arith.constant 0 : index
    %5 = vector.load %arg5[%c0_4, %c0_5] : memref<8x512xf32, #tpu.memory_space<vmem>>, vector<8x512xf32>
    %6 = math.absf %3 : vector<8x512xf32>
    %cst = arith.constant 0.000000e+00 : f32
    %7 = vector.broadcast %cst : f32 to vector<8x512xf32>
    %8 = arith.subf %7, %6 : vector<8x512xf32>
    %9 = math.exp %8 : vector<8x512xf32>
    %cst_6 = arith.constant 0.000000e+00 : f32
    %10 = vector.broadcast %cst_6 : f32 to vector<8x512xf32>
    %11 = arith.maximumf %3, %10 : vector<8x512xf32>
    %12 = arith.mulf %3, %4 : vector<8x512xf32>
    %13 = arith.subf %11, %12 : vector<8x512xf32>
    %14 = math.log1p %9 : vector<8x512xf32>
    %15 = arith.addf %13, %14 : vector<8x512xf32>
    %cst_7 = arith.constant 1.000000e+00 : f32
    %16 = vector.broadcast %cst_7 : f32 to vector<8x512xf32>
    %17 = arith.addf %16, %9 : vector<8x512xf32>
    %cst_8 = arith.constant 1.000000e+00 : f32
    %18 = vector.broadcast %cst_8 : f32 to vector<8x512xf32>
    %19 = arith.divf %18, %17 : vector<8x512xf32>
    %cst_9 = arith.constant 0.000000e+00 : f32
    %20 = vector.broadcast %cst_9 : f32 to vector<8x512xf32>
    %21 = arith.cmpf oge, %3, %20 : vector<8x512xf32>
    %22 = arith.mulf %9, %19 : vector<8x512xf32>
    %23 = arith.select %21, %19, %22 : vector<8x512xi1>, vector<8x512xf32>
    %cst_10 = arith.constant 2.500000e-01 : f32
    %24 = vector.broadcast %cst_10 : f32 to vector<8x512xf32>
    %25 = arith.mulf %4, %24 : vector<8x512xf32>
    %cst_11 = arith.constant 1.000000e+00 : f32
    %26 = vector.broadcast %cst_11 : f32 to vector<8x512xf32>
    %27 = arith.subf %26, %4 : vector<8x512xf32>
    %cst_12 = arith.constant 7.500000e-01 : f32
    %28 = vector.broadcast %cst_12 : f32 to vector<8x512xf32>
    %29 = arith.mulf %27, %28 : vector<8x512xf32>
    %30 = arith.addf %25, %29 : vector<8x512xf32>
    %31 = arith.subf %4, %23 : vector<8x512xf32>
    %32 = math.absf %31 : vector<8x512xf32>
    %33 = math.sqrt %32 : vector<8x512xf32>
    %34 = arith.mulf %32, %33 : vector<8x512xf32>
    %35 = arith.mulf %15, %30 : vector<8x512xf32>
    %36 = arith.mulf %35, %34 : vector<8x512xf32>
    %37 = arith.addf %5, %36 : vector<8x512xf32>
    %c0_13 = arith.constant 0 : index
    %c0_14 = arith.constant 0 : index
    %38 = vector.load %arg5[%c0_13, %c0_14] : memref<8x512xf32, #tpu.memory_space<vmem>>, vector<8x512xf32>
    tpu.vector_store %arg5[%c0_13, %c0_14], %37 {strides = array<i32>} : memref<8x512xf32, #tpu.memory_space<vmem>>, vector<8x512xf32>,
    %c0_i32_15 = arith.constant 0 : i32
    %39 = arith.cmpi eq, %arg1, %c0_i32_15 : i32
    %40 = arith.extui %39 : i1 to i32
    %c0_i32_16 = arith.constant 0 : i32
    %41 = arith.cmpi ne, %40, %c0_i32_16 : i32
    scf.if %41 {
      %c0_17 = arith.constant 0 : index
      %c0_18 = arith.constant 0 : index
      %42 = vector.load %arg5[%c0_17, %c0_18] : memref<8x512xf32, #tpu.memory_space<vmem>>, vector<8x512xf32>
      %43 = vector.shape_cast %42 : vector<8x512xf32> to vector<1x8x512xf32>
      %cst_19 = arith.constant dense<0.000000e+00> : vector<8x512xf32>
      %44 = vector.multi_reduction <add>, %43, %cst_19 [0] : vector<1x8x512xf32> to vector<8x512xf32>
      %c0_20 = arith.constant 0 : index
      %c0_21 = arith.constant 0 : index
      %45 = vector.load %arg4[%c0_20, %c0_21] : memref<8x512xf32, #tpu.memory_space<vmem>>, vector<8x512xf32>
      tpu.vector_store %arg4[%c0_20, %c0_21], %44 {strides = array<i32>} : memref<8x512xf32, #tpu.memory_space<vmem>>, vector<8x512xf32>,
    } else {
    }
    return
  }
  func.func @transform_0(%arg0: i32, %arg1: i32) -> (i32, i32) {
    %c1_i32 = arith.constant 1 : i32
    %0 = arith.muli %arg0, %c1_i32 : i32
    %1 = arith.addi %0, %arg1 : i32
    %c0_i32 = arith.constant 0 : i32
    %c0_i32_0 = arith.constant 0 : i32
    return %1, %c0_i32 : i32, i32
  }
  func.func @transform_1(%arg0: i32, %arg1: i32) -> (i32, i32) {
    %c1_i32 = arith.constant 1 : i32
    %0 = arith.muli %arg0, %c1_i32 : i32
    %1 = arith.addi %0, %arg1 : i32
    %c0_i32 = arith.constant 0 : i32
    %c0_i32_0 = arith.constant 0 : i32
    return %1, %c0_i32 : i32, i32
  }
  func.func @transform_2(%arg0: i32, %arg1: i32) -> (i32, i32) {
    %c0_i32 = arith.constant 0 : i32
    %c0_i32_0 = arith.constant 0 : i32
    return %arg0, %c0_i32 : i32, i32
  }
}

</mosaic_0001>

<llo_original>
// kernel: tpu_custom_call.1
$region0: #{tpu_custom_call.1}
  #allocation0 [shape = 'u32[]', space=smem, size = 0x4, offset = 0x4, fixed_abs, tag = 'smem constant byte address 0x4 - core index']
  #allocation1 [shape = 'u32[144,128]{1,0:T(1,128)}', space=vmem, size = 0x12000, scoped, tag = 'internal scratch']
  #allocation2 [shape = 'f32[8,512]{1,0:T(8,128)}', space=vmem, size = 0x4000, scoped, tag = 'scratch operand']
  %s0 = inlined_call_operand.hbm [shape: f32[16,512], index: 0, kind: input, shape index: {}]
  %s1 = inlined_call_operand.hbm [shape: f32[16,512], index: 1, kind: input, shape index: {}]
  %s2 = inlined_call_operand.hbm [shape: f32[16,512], index: 2, kind: output, shape index: {}]
  %s3 = sld [smem:[#allocation0]]
  $region57: #{tpu_custom_call.1} parent=0
    _
  %s5 = ssub.s32 1, %s3
  %s6 = scalar_select 0, %s5, %s3
  $region1: #{tpu_custom_call.1} parent=0
    #allocation3 [shape = 'u8[32768]{0}', space=vmem, size = 0x8000, scoped, tag = 'input window, operand 0']
    #allocation4 [shape = 's32[2]{0}', space=sflag, size = 0x8, scoped, tag = 'scoped memory for tpu_custom_call.1']
    #allocation5 [shape = 's32[2]{0}', space=sflag, size = 0x8, scoped, tag = 'scoped memory for tpu_custom_call.1']
    #allocation6 [shape = 'u8[32768]{0}', space=vmem, size = 0x8000, scoped, tag = 'input window, operand 1']
    #allocation7 [shape = 's32[2]{0}', space=sflag, size = 0x8, scoped, tag = 'scoped memory for tpu_custom_call.1']
    #allocation8 [shape = 'u8[32768]{0}', space=vmem, size = 0x8000, scoped, tag = 'output window, operand 0']
    %7 = vsyncpa [#allocation4], 0
    %s8 = scalar_lea.sflag [#allocation4], 1
    %9 = vsyncpa %s8, 0
    %10 = vsyncpa [#allocation7], 0
    %s11 = scalar_lea.sflag [#allocation7], 1
    %12 = vsyncpa %s11, 0
    %13 = vsyncpa [#allocation5], 0
    %s14 = scalar_lea.sflag [#allocation5], 1
    %15 = vsyncpa %s14, 0
    loop: start=0, step=1, limit=4
    $region2: #{tpu_custom_call.1} parent=1 // loop_pre_header
      _
    $region3: #{tpu_custom_call.1} parent=1 // loop_header
      %s17 = sphi 0, %s21
      %p18 = scmp.ge.s32.totalorder %s17, 4
      %s24 = sphi 0, %s36
      %s25 = sphi 0, %s32
      %s26 = sphi 0, %s24
      %s27 = sphi 0, %s25
      %s28 = sphi 0, %s26
      %s29 = sphi 0, %s27
      %s41 = sphi 0, %s43
      %s44 = sphi 0, %s41
      %s45 = sphi 0, %s44
      %s61 = sphi 0, %s45
      %s69 = sphi 0, %s71
      %s72 = sphi 0, %s69
      %s73 = sphi 0, %s72
      %s89 = sphi 0, %s73
      %s95 = sphi 0, %s97
      %s98 = sphi 0, %s95
      %s99 = sphi 0, %s98
      %s115 = sphi 0, %s99
    $region4: #{tpu_custom_call.1} parent=1 // loop_header_branch
      %20 = sbr.rel (%p18) target = $region8
    $region5: #{tpu_custom_call.1} parent=1 // loop_body
      %s22 = ssub.s32 %s17, 1
      %s23 = ssub.s32 %s17, 2
      %s30 = sadd.s32 1, %s25
      %p31 = scmp.ge.s32.totalorder %s30, 1
      %s32 = scalar_select %p31, 0, %s30
      %s33 = sadd.s32 1, %s24
      %s34 = scalar_select %p31, %s33, %s24
      %p35 = scmp.ge.s32.totalorder %s34, 2
      %s36 = scalar_select %p35, 0, %s34
      %s37 = sadd.s32 %s24, %s25
      %s38 = sadd.s32 %s36, %s32
      %s39 = ssub.s32 %s37, %s38
      %p40 = scmp.eq.s32.totalorder %s39, 0
      %s42 = sadd.s32 %s41, 1
      %s43 = scalar_select %p40, %s41, %s42
      %p46 = pneg %p40
      %p47 = scmp.eq.s32.totalorder %s17, 1
      %p48 = por %p46, %p47
      %p49 = scmp.ne.s32.totalorder %s41, %s44
      %p50 = scmp.eq.s32.totalorder %s17, 0
      %p51 = por %p49, %p50
      %p52 = scmp.ne.s32.totalorder %s41, %s44
      %p53 = scmp.eq.s32.totalorder %s22, 1
      %p54 = por %p52, %p53
      %p55 = scmp.ne.s32.totalorder %s44, %s45
      %p56 = scmp.eq.s32.totalorder %s22, 0
      %p57 = por %p55, %p56
      %p58 = scmp.ne.s32.totalorder %s44, %s45
      %p59 = scmp.eq.s32.totalorder %s23, 1
      %p60 = por %p58, %p59
      %p62 = scmp.ne.s32.totalorder %s45, %s61
      %p63 = scmp.eq.s32.totalorder %s23, 0
      %p64 = por %p62, %p63
      %s65 = sadd.s32 %s24, %s25
      %s66 = sadd.s32 %s36, %s32
      %s67 = ssub.s32 %s65, %s66
      %p68 = scmp.eq.s32.totalorder %s67, 0
      %s70 = sadd.s32 %s69, 1
      %s71 = scalar_select %p68, %s69, %s70
      %p74 = pneg %p68
      %p75 = scmp.eq.s32.totalorder %s17, 1
      %p76 = por %p74, %p75
      %p77 = scmp.ne.s32.totalorder %s69, %s72
      %p78 = scmp.eq.s32.totalorder %s17, 0
      %p79 = por %p77, %p78
      %p80 = scmp.ne.s32.totalorder %s69, %s72
      %p81 = scmp.eq.s32.totalorder %s22, 1
      %p82 = por %p80, %p81
      %p83 = scmp.ne.s32.totalorder %s72, %s73
      %p84 = scmp.eq.s32.totalorder %s22, 0
      %p85 = por %p83, %p84
      %p86 = scmp.ne.s32.totalorder %s72, %s73
      %p87 = scmp.eq.s32.totalorder %s23, 1
      %p88 = por %p86, %p87
      %p90 = scmp.ne.s32.totalorder %s73, %s89
      %p91 = scmp.eq.s32.totalorder %s23, 0
      %p92 = por %p90, %p91
      %s93 = ssub.s32 %s24, %s36
      %p94 = scmp.eq.s32.totalorder %s93, 0
      %s96 = sadd.s32 %s95, 1
      %s97 = scalar_select %p94, %s95, %s96
      %p100 = pneg %p94
      %p101 = scmp.eq.s32.totalorder %s17, 1
      %p102 = por %p100, %p101
      %p103 = scmp.ne.s32.totalorder %s95, %s98
      %p104 = scmp.eq.s32.totalorder %s17, 0
      %p105 = por %p103, %p104
      %p106 = scmp.ne.s32.totalorder %s95, %s98
      %p107 = scmp.eq.s32.totalorder %s22, 1
      %p108 = por %p106, %p107
      %p109 = scmp.ne.s32.totalorder %s98, %s99
      %p110 = scmp.eq.s32.totalorder %s22, 0
      %p111 = por %p109, %p110
      %p112 = scmp.ne.s32.totalorder %s98, %s99
      %p113 = scmp.eq.s32.totalorder %s23, 1
      %p114 = por %p112, %p113
      %p116 = scmp.ne.s32.totalorder %s99, %s115
      %p117 = scmp.eq.s32.totalorder %s23, 0
      %p118 = por %p116, %p117
      %p119 = scmp.le.s32.totalorder 1, %s17
      %p120 = scmp.lt.s32.totalorder %s17, 3
      %p121 = pnand %p119, %p120
      %p122 = pneg %p121
      // Predicated region
      $region9: #{tpu_custom_call.1} parent=5 // pred_check
        _
      $region10: #{tpu_custom_call.1} parent=5 // pred_check_branch
        %124 = sbr.rel (%p121) target = $region12
      $region11: #{tpu_custom_call.1} parent=5 // pred_region
        %s125 = ssub.s32 %s17, 1
      $region12: #{tpu_custom_call.1} parent=5 // pred_fallthru
        _
      %p126 = scmp.lt.s32.totalorder %s17, 2
      // Predicated region
      $region13: #{tpu_custom_call.1} parent=5 // pred_check
        %p127 = pneg %p126
      $region14: #{tpu_custom_call.1} parent=5 // pred_check_branch
        %129 = sbr.rel (%p127) target = $region16
      $region15: #{tpu_custom_call.1} parent=5 // pred_region
        // Predicated region
        $region17: #{tpu_custom_call.1} parent=15 // pred_check
          %p130 = pneg %p51
        $region18: #{tpu_custom_call.1} parent=15 // pred_check_branch
          %132 = sbr.rel (%p130) target = $region20
        $region19: #{tpu_custom_call.1} parent=15 // pred_region
          %s133 = sand.u32 %s41, 1
          %s134 = scalar_lea.sflag [#allocation4], %s133
          %s135 = sand.u32 %s41, 1
          %s136 = smul.addr %s135, 32
          %s137 = scalar_lea.vmem [#allocation3], %s136
          %s138 = sadd.s32 %s24, %s25
          %s140 = ssub.s32 512, 512
          %141 = vsyncadd %s134, %s140
          %s142 = smul.addr %s138, 4
          %s143 = smul.addr %s142, 128
          %s144 = scalar_lea.hbm %s0, %s143
          %s146 = sshll.u32 %s137, 4
          %s147 = int_to_ptr.vmem [resolvable:$true] %s146
          %149 = dma.hbm_to_vmem [thread:$0]  %s144, 512, %s147, %s134
        $region20: #{tpu_custom_call.1} parent=15 // pred_fallthru
          _
        // Predicated region
        $region21: #{tpu_custom_call.1} parent=15 // pred_check
          %p150 = pneg %p79
        $region22: #{tpu_custom_call.1} parent=15 // pred_check_branch
          %152 = sbr.rel (%p150) target = $region24
        $region23: #{tpu_custom_call.1} parent=15 // pred_region
          %s153 = sand.u32 %s69, 1
          %s154 = scalar_lea.sflag [#allocation7], %s153
          %s155 = sand.u32 %s69, 1
          %s156 = smul.addr %s155, 32
          %s157 = scalar_lea.vmem [#allocation6], %s156
          %s158 = sadd.s32 %s24, %s25
          %s160 = ssub.s32 512, 512
          %161 = vsyncadd %s154, %s160
          %s162 = smul.addr %s158, 4
          %s163 = smul.addr %s162, 128
          %s164 = scalar_lea.hbm %s1, %s163
          %s166 = sshll.u32 %s157, 4
          %s167 = int_to_ptr.vmem [resolvable:$true] %s166
          %169 = dma.hbm_to_vmem [thread:$0]  %s164, 512, %s167, %s154
        $region24: #{tpu_custom_call.1} parent=15 // pred_fallthru
          _
      $region16: #{tpu_custom_call.1} parent=5 // pred_fallthru
        _
      %p170 = scmp.le.s32.totalorder 1, %s17
      %p171 = scmp.lt.s32.totalorder %s17, 3
      %p172 = pnand %p170, %p171
      %p173 = pneg %p172
      // Predicated region
      $region25: #{tpu_custom_call.1} parent=5 // pred_check
        _
      $region26: #{tpu_custom_call.1} parent=5 // pred_check_branch
        %175 = sbr.rel (%p172) target = $region28
      $region27: #{tpu_custom_call.1} parent=5 // pred_region
        %s176 = ssub.s32 %s17, 1
        %s177 = sand.u32 %s44, 1
        %s178 = scalar_lea.sflag [#allocation4], %s177
        %s179 = sand.u32 %s44, 1
        %s180 = smul.addr %s179, 32
        %s181 = scalar_lea.vmem [#allocation3], %s180
        // Predicated region
        $region29: #{tpu_custom_call.1} parent=27 // pred_check
          %p182 = pneg %p57
        $region30: #{tpu_custom_call.1} parent=27 // pred_check_branch
          %184 = sbr.rel (%p182) target = $region32
        $region31: #{tpu_custom_call.1} parent=27 // pred_region
          %185 = dma.done %s178, 512
        $region32: #{tpu_custom_call.1} parent=27 // pred_fallthru
          _
        %s186 = sand.u32 %s72, 1
        %s187 = scalar_lea.sflag [#allocation7], %s186
        %s188 = sand.u32 %s72, 1
        %s189 = smul.addr %s188, 32
        %s190 = scalar_lea.vmem [#allocation6], %s189
        // Predicated region
        $region33: #{tpu_custom_call.1} parent=27 // pred_check
          %p191 = pneg %p85
        $region34: #{tpu_custom_call.1} parent=27 // pred_check_branch
          %193 = sbr.rel (%p191) target = $region36
        $region35: #{tpu_custom_call.1} parent=27 // pred_region
          %194 = dma.done %s187, 512
        $region36: #{tpu_custom_call.1} parent=27 // pred_fallthru
          _
        %s195 = sand.u32 %s44, 1
        %s196 = scalar_lea.sflag [#allocation4], %s195
        %s197 = sand.u32 %s44, 1
        %s198 = smul.addr %s197, 32
        %s199 = scalar_lea.vmem [#allocation3], %s198
        %p200 = pneg %p57
        %p201 = pneg %p54
        %s202 = sand.u32 %s72, 1
        %s203 = scalar_lea.sflag [#allocation7], %s202
        %s204 = sand.u32 %s72, 1
        %s205 = smul.addr %s204, 32
        %s206 = scalar_lea.vmem [#allocation6], %s205
        %p207 = pneg %p85
        %p208 = pneg %p82
        %p209 = pneg %p111
        %p210 = pneg %p108
        %s211 = sand.u32 %s98, 1
        %s212 = scalar_lea.sflag [#allocation5], %s211
        %s213 = sand.u32 %s98, 1
        %s214 = smul.addr %s213, 32
        %s215 = scalar_lea.vmem [#allocation8], %s214
        %s216 = sadd.s32 %s26, %s27
        %s217 = sadd.s32 %s26, %s27
        %p218 = scmp.eq.s32.totalorder %s27, 0
        // Predicated region
        $region37: #{tpu_custom_call.1} parent=27 // pred_check
          %p219 = pneg %p218
        $region38: #{tpu_custom_call.1} parent=27 // pred_check_branch
          %221 = sbr.rel (%p219) target = $region40
        $region39: #{tpu_custom_call.1} parent=27 // pred_region
          %222 = vst [vmem:[#allocation2] sm:$0xff] 0.0
          %223 = vst [vmem:[#allocation2 + $0x8] sm:$0xff] 0.0
          %224 = vst [vmem:[#allocation2 + $0x10] sm:$0xff] 0.0
          %225 = vst [vmem:[#allocation2 + $0x18] sm:$0xff] 0.0
        $region40: #{tpu_custom_call.1} parent=27 // pred_fallthru
          _
        %v226 = vld [vmem:[%s181] sm:$0xff]
        %v227 = vld [vmem:[%s181 + $0x8] sm:$0xff]
        %v228 = vld [vmem:[%s181 + $0x10] sm:$0xff]
        %v229 = vld [vmem:[%s181 + $0x18] sm:$0xff]
        %v230 = vld [vmem:[%s190] sm:$0xff]
        %v231 = vld [vmem:[%s190 + $0x8] sm:$0xff]
        %v232 = vld [vmem:[%s190 + $0x10] sm:$0xff]
        %v233 = vld [vmem:[%s190 + $0x18] sm:$0xff]
        %v234 = vld [vmem:[#allocation2] sm:$0xff]
        %v235 = vld [vmem:[#allocation2 + $0x8] sm:$0xff]
        %v236 = vld [vmem:[#allocation2 + $0x10] sm:$0xff]
        %v237 = vld [vmem:[#allocation2 + $0x18] sm:$0xff]
        %v238 = vand.u32 2147483647, %v226
        %v239 = vand.u32 2147483647, %v227
        %v240 = vand.u32 2147483647, %v228
        %v241 = vand.u32 2147483647, %v229
        %v242 = vsub.f32 0.0, %v238
        %v243 = vsub.f32 0.0, %v239
        %v244 = vsub.f32 0.0, %v240
        %v245 = vsub.f32 0.0, %v241
        %v246 = vmul.f32 %v242, 1.442695
        %v247 = vpow.pop %v246
        %v248 = vmul.f32 %v243, 1.442695
        %v249 = vpow.pop %v248
        %v250 = vmul.f32 %v244, 1.442695
        %v251 = vpow.pop %v250
        %v252 = vmul.f32 %v245, 1.442695
        %v253 = vpow.pop %v252
        %v254 = vmax.f32 %v226, 0.0
        %v255 = vmax.f32 %v227, 0.0
        %v256 = vmax.f32 %v228, 0.0
        %v257 = vmax.f32 %v229, 0.0
        %v258 = vmul.f32 %v226, %v230
        %v259 = vmul.f32 %v227, %v231
        %v260 = vmul.f32 %v228, %v232
        %v261 = vmul.f32 %v229, %v233
        %v262 = vsub.f32 %v254, %v258
        %v263 = vsub.f32 %v255, %v259
        %v264 = vsub.f32 %v256, %v260
        %v265 = vsub.f32 %v257, %v261
        %v266 = vadd.f32 %v247, 1.0
        %v267 = vlog2.pop %v266
        %v268 = vmul.f32 %v267, 0.6931472
        %v269 = vmul.f32 -0.5, %v247
        %v270 = vadd.f32 %v269, 1.0
        %v271 = vmul.f32 %v270, %v247
        %v272 = vand.u32 2147483647, %v247
        %vm273 = vcmp.lt.f32.partialorder %v272, 0.0004427343
        %v274 = vsel %vm273, %v271, %v268
        %v275 = vadd.f32 %v249, 1.0
        %v276 = vlog2.pop %v275
        %v277 = vmul.f32 %v276, 0.6931472
        %v278 = vmul.f32 -0.5, %v249
        %v279 = vadd.f32 %v278, 1.0
        %v280 = vmul.f32 %v279, %v249
        %v281 = vand.u32 2147483647, %v249
        %vm282 = vcmp.lt.f32.partialorder %v281, 0.0004427343
        %v283 = vsel %vm282, %v280, %v277
        %v284 = vadd.f32 %v251, 1.0
        %v285 = vlog2.pop %v284
        %v286 = vmul.f32 %v285, 0.6931472
        %v287 = vmul.f32 -0.5, %v251
        %v288 = vadd.f32 %v287, 1.0
        %v289 = vmul.f32 %v288, %v251
        %v290 = vand.u32 2147483647, %v251
        %vm291 = vcmp.lt.f32.partialorder %v290, 0.0004427343
        %v292 = vsel %vm291, %v289, %v286
        %v293 = vadd.f32 %v253, 1.0
        %v294 = vlog2.pop %v293
        %v295 = vmul.f32 %v294, 0.6931472
        %v296 = vmul.f32 -0.5, %v253
        %v297 = vadd.f32 %v296, 1.0
        %v298 = vmul.f32 %v297, %v253
        %v299 = vand.u32 2147483647, %v253
        %vm300 = vcmp.lt.f32.partialorder %v299, 0.0004427343
        %v301 = vsel %vm300, %v298, %v295
        %v302 = vadd.f32 %v262, %v274
        %v303 = vadd.f32 %v263, %v283
        %v304 = vadd.f32 %v264, %v292
        %v305 = vadd.f32 %v265, %v301
        %v306 = vadd.f32 %v247, 1.0
        %v307 = vadd.f32 %v249, 1.0
        %v308 = vadd.f32 %v251, 1.0
        %v309 = vadd.f32 %v253, 1.0
        %v310 = vrcp.pop %v306
        %v311 = vmul.f32 1.0, %v310
        %v312 = vrcp.pop %v307
        %v313 = vmul.f32 1.0, %v312
        %v314 = vrcp.pop %v308
        %v315 = vmul.f32 1.0, %v314
        %v316 = vrcp.pop %v309
        %v317 = vmul.f32 1.0, %v316
        %vm318 = vcmp.ge.f32.partialorder %v226, 0.0
        %vm319 = vcmp.ge.f32.partialorder %v227, 0.0
        %vm320 = vcmp.ge.f32.partialorder %v228, 0.0
        %vm321 = vcmp.ge.f32.partialorder %v229, 0.0
        %v322 = vmul.f32 %v247, %v311
        %v323 = vmul.f32 %v249, %v313
        %v324 = vmul.f32 %v251, %v315
        %v325 = vmul.f32 %v253, %v317
        %v326 = vsel %vm318, %v311, %v322
        %v327 = vsel %vm319, %v313, %v323
        %v328 = vsel %vm320, %v315, %v324
        %v329 = vsel %vm321, %v317, %v325
        %v330 = vmul.f32 %v230, 0.25
        %v331 = vmul.f32 %v231, 0.25
        %v332 = vmul.f32 %v232, 0.25
        %v333 = vmul.f32 %v233, 0.25
        %v334 = vsub.f32 1.0, %v230
        %v335 = vsub.f32 1.0, %v231
        %v336 = vsub.f32 1.0, %v232
        %v337 = vsub.f32 1.0, %v233
        %v338 = vmul.f32 %v334, 0.75
        %v339 = vmul.f32 %v335, 0.75
        %v340 = vmul.f32 %v336, 0.75
        %v341 = vmul.f32 %v337, 0.75
        %v342 = vadd.f32 %v330, %v338
        %v343 = vadd.f32 %v331, %v339
        %v344 = vadd.f32 %v332, %v340
        %v345 = vadd.f32 %v333, %v341
        %v346 = vsub.f32 %v230, %v326
        %v347 = vsub.f32 %v231, %v327
        %v348 = vsub.f32 %v232, %v328
        %v349 = vsub.f32 %v233, %v329
        %v350 = vand.u32 2147483647, %v346
        %v351 = vand.u32 2147483647, %v347
        %v352 = vand.u32 2147483647, %v348
        %v353 = vand.u32 2147483647, %v349
        %v354 = vrsqrt.pop %v350
        %v355 = vmul.f32 %v350, %v354
        %vm356 = vcmp.eq.f32.partialorder %v350, inf
        %v357 = vsel %vm356, %v350, %v355
        %vm358 = vcmp.eq.f32.partialorder %v350, 0.0
        %v359 = vand.u32 %v350, 2147483648
        %v360 = vsel %vm358, %v359, %v357
        %v361 = vrsqrt.pop %v351
        %v362 = vmul.f32 %v351, %v361
        %vm363 = vcmp.eq.f32.partialorder %v351, inf
        %v364 = vsel %vm363, %v351, %v362
        %vm365 = vcmp.eq.f32.partialorder %v351, 0.0
        %v366 = vand.u32 %v351, 2147483648
        %v367 = vsel %vm365, %v366, %v364
        %v368 = vrsqrt.pop %v352
        %v369 = vmul.f32 %v352, %v368
        %vm370 = vcmp.eq.f32.partialorder %v352, inf
        %v371 = vsel %vm370, %v352, %v369
        %vm372 = vcmp.eq.f32.partialorder %v352, 0.0
        %v373 = vand.u32 %v352, 2147483648
        %v374 = vsel %vm372, %v373, %v371
        %v375 = vrsqrt.pop %v353
        %v376 = vmul.f32 %v353, %v375
        %vm377 = vcmp.eq.f32.partialorder %v353, inf
        %v378 = vsel %vm377, %v353, %v376
        %vm379 = vcmp.eq.f32.partialorder %v353, 0.0
        %v380 = vand.u32 %v353, 2147483648
        %v381 = vsel %vm379, %v380, %v378
        %v382 = vmul.f32 %v350, %v360
        %v383 = vmul.f32 %v351, %v367
        %v384 = vmul.f32 %v352, %v374
        %v385 = vmul.f32 %v353, %v381
        %v386 = vmul.f32 %v302, %v342
        %v387 = vmul.f32 %v303, %v343
        %v388 = vmul.f32 %v304, %v344
        %v389 = vmul.f32 %v305, %v345
        %v390 = vmul.f32 %v386, %v382
        %v391 = vmul.f32 %v387, %v383
        %v392 = vmul.f32 %v388, %v384
        %v393 = vmul.f32 %v389, %v385
        %v394 = vadd.f32 %v234, %v390
        %v395 = vadd.f32 %v235, %v391
        %v396 = vadd.f32 %v236, %v392
        %v397 = vadd.f32 %v237, %v393
        %398 = vst [vmem:[#allocation2] sm:$0xff] %v394
        %399 = vst [vmem:[#allocation2 + $0x8] sm:$0xff] %v395
        %400 = vst [vmem:[#allocation2 + $0x10] sm:$0xff] %v396
        %401 = vst [vmem:[#allocation2 + $0x18] sm:$0xff] %v397
        // Predicated region
        $region41: #{tpu_custom_call.1} parent=27 // pred_check
          %p402 = pneg %p218
        $region42: #{tpu_custom_call.1} parent=27 // pred_check_branch
          %404 = sbr.rel (%p402) target = $region44
        $region43: #{tpu_custom_call.1} parent=27 // pred_region
          %v405 = vld [vmem:[#allocation2] sm:$0xff]
          %v406 = vld [vmem:[#allocation2 + $0x8] sm:$0xff]
          %v407 = vld [vmem:[#allocation2 + $0x10] sm:$0xff]
          %v408 = vld [vmem:[#allocation2 + $0x18] sm:$0xff]
          %v409 = vadd.f32 %v405, 0.0
          %v410 = vadd.f32 %v406, 0.0
          %v411 = vadd.f32 %v407, 0.0
          %v412 = vadd.f32 %v408, 0.0
          %413 = vst [vmem:[%s215] sm:$0xff] %v409
          %414 = vst [vmem:[%s215 + $0x8] sm:$0xff] %v410
          %415 = vst [vmem:[%s215 + $0x10] sm:$0xff] %v411
          %416 = vst [vmem:[%s215 + $0x18] sm:$0xff] %v412
        $region44: #{tpu_custom_call.1} parent=27 // pred_fallthru
          _
        %s417 = sand.u32 %s98, 1
        %s418 = scalar_lea.sflag [#allocation5], %s417
        %s419 = sand.u32 %s98, 1
        %s420 = smul.addr %s419, 32
        %s421 = scalar_lea.vmem [#allocation8], %s420
        // Predicated region
        $region45: #{tpu_custom_call.1} parent=27 // pred_check
          %p422 = pneg %p108
        $region46: #{tpu_custom_call.1} parent=27 // pred_check_branch
          %424 = sbr.rel (%p422) target = $region48
        $region47: #{tpu_custom_call.1} parent=27 // pred_region
          %s426 = ssub.s32 512, 512
          %427 = vsyncadd %s418, %s426
          %s428 = smul.addr %s26, 4
          %s429 = smul.addr %s428, 128
          %s430 = scalar_lea.hbm %s2, %s429
          %s432 = sshll.u32 %s421, 4
          %s433 = int_to_ptr.vmem [resolvable:$true] %s432
          %435 = dma.vmem_to_hbm [thread:$0]  %s433, 512, %s430, %s418
        $region48: #{tpu_custom_call.1} parent=27 // pred_fallthru
          _
      $region28: #{tpu_custom_call.1} parent=5 // pred_fallthru
        _
      %p436 = scmp.le.s32.totalorder 2, %s17
      // Predicated region
      $region49: #{tpu_custom_call.1} parent=5 // pred_check
        %p437 = pneg %p436
      $region50: #{tpu_custom_call.1} parent=5 // pred_check_branch
        %439 = sbr.rel (%p437) target = $region52
      $region51: #{tpu_custom_call.1} parent=5 // pred_region
        %s440 = ssub.s32 %s17, 2
        // Predicated region
        $region53: #{tpu_custom_call.1} parent=51 // pred_check
          %p441 = pneg %p114
        $region54: #{tpu_custom_call.1} parent=51 // pred_check_branch
          %443 = sbr.rel (%p441) target = $region56
        $region55: #{tpu_custom_call.1} parent=51 // pred_region
          %s444 = sand.u32 %s99, 1
          %s445 = scalar_lea.sflag [#allocation5], %s444
          %s446 = sand.u32 %s99, 1
          %s447 = smul.addr %s446, 32
          %s448 = scalar_lea.vmem [#allocation8], %s447
          %449 = dma.done %s445, 512
        $region56: #{tpu_custom_call.1} parent=51 // pred_fallthru
          _
      $region52: #{tpu_custom_call.1} parent=5 // pred_fallthru
        _
    $region6: #{tpu_custom_call.1} parent=1 // loop_footer
      %s21 = sadd.s32 1, %s17
    $region7: #{tpu_custom_call.1} parent=1 // loop_footer_branch
      %16 = sbr.rel target = $region3
    $region8: #{tpu_custom_call.1} parent=1 // loop_exit
      _
    %450 = vsyncpa [#allocation4], 1
    %s451 = scalar_lea.sflag [#allocation4], 1
    %452 = vsyncpa %s451, 1
    %453 = vsyncpa [#allocation7], 1
    %s454 = scalar_lea.sflag [#allocation7], 1
    %455 = vsyncpa %s454, 1
    %456 = vsyncpa [#allocation5], 1
    %s457 = scalar_lea.sflag [#allocation5], 1
    %458 = vsyncpa %s457, 1

</llo_original>
